<compile_context>
chip_gen: v7x
topology: tpu7x:2x2x1
jax: 0.10.0
libtpu: 0.0.40
codegen_flags: <defaults>
</compile_context>

<pallas_src>
import jax
import jax.numpy as jnp
from jax.experimental import pallas as pl
from jax.experimental.pallas import tpu as pltpu


def _pick_row_tile(m, target=512, min_steps=2):
    """Largest divisor of m that is <= target, preferring (a) at least
    `min_steps` grid steps (so both v7x TensorCores get work), (b) a multiple
    of 16 (bf16 sublane packing).  Falls back to m itself (a full-extent block
    is always layout-legal)."""
    cands = [d for d in range(1, min(target, m) + 1)
             if m % d == 0 and (d % 8 == 0 or d == m)]
    if not cands:
        return m
    return max(cands, key=lambda d: ((m // d) >= min_steps, d % 16 == 0, d))


def _patch_embed_kernel(x_ref, w_ref, b_ref, o_ref):
    # x_ref: (tm, K) bf16 patch rows; w_ref: (K, E) bf16 resident weight;
    # b_ref: (1, E) f32 bias; o_ref: (tm, E) bf16.
    # MXU matmul with f32 accumulation, f32 bias add, bf16 store.
    acc = jnp.dot(x_ref[...], w_ref[...], preferred_element_type=jnp.float32)
    o_ref[...] = (acc + b_ref[...]).astype(o_ref.dtype)


def patch_embed_matmul(patches, w, b, tm=512, out_dtype=jnp.bfloat16):
    """(M, K) @ (K, E) + b on the MXU.  Returns (M, E) in out_dtype."""
    M, K = patches.shape
    Kw, E = w.shape
    assert Kw == K

    # Row tile: divisor of M (no pad copy, no post-slice), big enough to fill
    # the MXU and amortize grid-step overhead, small enough that the grid has
    # >= 2 steps so the v7x megacore can shard the "parallel" axis.
    tm_eff = _pick_row_tile(M, target=tm, min_steps=2)

    return pl.pallas_call(
        _patch_embed_kernel,
        out_shape=jax.ShapeDtypeStruct((M, E), out_dtype),
        grid_spec=pltpu.PrefetchScalarGridSpec(
            num_scalar_prefetch=0,
            grid=(M // tm_eff,),
            in_specs=[
                pl.BlockSpec((tm_eff, K), lambda i: (i, 0)),  # patch rows
                pl.BlockSpec((K, E), lambda i: (0, 0)),       # resident weight
                pl.BlockSpec((1, E), lambda i: (0, 0)),       # bias (f32)
            ],
            out_specs=pl.BlockSpec((tm_eff, E), lambda i: (i, 0)),
        ),
        compiler_params=pltpu.CompilerParams(
            dimension_semantics=("parallel",),    # shard M over TCs on v7x
            vmem_limit_bytes=48 * 1024 * 1024,    # headroom even on v7x 64MiB
        ),
    )(patches, w, b)


def patch_embed_forward(x, weight, bias, patch_space, patch_time,
                        tm=512, out_dtype=jnp.bfloat16):
    """x: (B, T, C, H, W); weight: (E, C, ps, ps, pt); bias: (E,) -> (B, N, E).

    Matches the PyTorch forward: Conv3d(kernel=stride=(ps, ps, pt)) applied to
    x.permute(0,2,1,3,4), then flatten(2).transpose(1,2).  ps acts on T and H,
    pt acts on W, exactly as the module's forward implies.
    """
    B, T, C, H, W = x.shape
    ps, pt = patch_space, patch_time
    E = weight.shape[0]
    assert T % ps == 0 and H % ps == 0 and W % pt == 0, (
        "PatchEmbed requires T % patch_space == H % patch_space == "
        "W % patch_time == 0")
    nT, nH, nW = T // ps, H // ps, W // pt
    K = C * ps * ps * pt

    # One fused cast + space-to-depth pass over the activations (XLA fuses the
    # f32->bf16 convert into the transpose): x is read once in f32, patches
    # written once in bf16.  The permute(0,2,1,3,4) of the PyTorch forward is
    # folded into the K-element order of the weight below.
    # TODO(synk): folding this im2col into the kernel itself needs a
    # lane->sublane space-to-depth relayout that Mosaic has no cheap primitive
    # for; if this pass dominates profiles, try
    # pltpu.CompilerParams(allow_input_fusion=[True, False, False]).
    xr = x.astype(jnp.bfloat16).reshape(B, nT, ps, C, nH, ps, nW, pt)
    #    axes:                          b  od  kd C  oh  kh  ow  kw
    patches = jnp.transpose(xr, (0, 1, 4, 6, 2, 3, 5, 7)).reshape(
        B * nT * nH * nW, K)
    # patch rows ordered (b, od, oh, ow); K element order (kd, c, kh, kw).

    # Conv3d weight (E, C, kd, kh, kw) -> (K, E) with the same (kd, c, kh, kw)
    # K order (tiny, negligible cost).
    w2d = jnp.transpose(weight, (2, 1, 3, 4, 0)).reshape(K, E).astype(jnp.bfloat16)
    b2d = bias.reshape(1, E).astype(jnp.float32)

    out = patch_embed_matmul(patches, w2d, b2d, tm=tm, out_dtype=out_dtype)
    return out.reshape(B, nT * nH * nW, E)


if __name__ == "__main__":
    # Small config consistent with the module: in_chans=4, embed_dim=32,
    # patch_space=4, patch_time=2; x: (B=2, T=8, C=4, H=16, W=16).
    B, T, C, H, W = 2, 8, 4, 16, 16
    ps, pt, E = 4, 2, 32

    key = jax.random.PRNGKey(0)
    kx, kw, kb = jax.random.split(key, 3)
    x = jax.random.normal(kx, (B, T, C, H, W), dtype=jnp.float32)
    # Conv3d weight shape: (embed_dim, in_chans, ps, ps, pt).
    weight = jax.random.normal(kw, (E, C, ps, ps, pt), dtype=jnp.float32) * 0.02
    bias = jax.random.normal(kb, (E,), dtype=jnp.float32) * 0.02

    fwd = jax.jit(lambda x_, w_, b_: patch_embed_forward(x_, w_, b_, ps, pt))
    out = jax.block_until_ready(fwd(x, weight, bias))

    N = (T // ps) * (H // ps) * (W // pt)
    assert out.shape == (B, N, E), out.shape
    assert out.dtype == jnp.bfloat16, out.dtype

    # Pure-JAX reference: Conv3d with stride == kernel, plus bias.  Same
    # bf16-rounded operands, f32 accumulation; the kernel additionally rounds
    # its output to bf16, so compare with a bf16-sized tolerance.
    xp = jnp.transpose(x, (0, 2, 1, 3, 4)).astype(jnp.bfloat16)   # NCDHW
    wk = weight.astype(jnp.bfloat16)
    ref_conv = jax.lax.conv_general_dilated(
        xp, wk, window_strides=(ps, ps, pt), padding="VALID",
        dimension_numbers=("NCDHW", "OIDHW", "NCDHW"),
        preferred_element_type=jnp.float32,
        precision=jax.lax.Precision.HIGHEST)
    ref = jnp.transpose(ref_conv.reshape(B, E, -1), (0, 2, 1)) + bias.reshape(1, 1, E)

    out_f32 = out.astype(jnp.float32)
    max_err = float(jnp.max(jnp.abs(out_f32 - ref)))
    assert jnp.allclose(out_f32, ref, atol=1e-2, rtol=1e-2), f"mismatch: {max_err}"
    print("KERNEL_OK")
</pallas_src>

<mosaic_0001>
module attributes {stable_mosaic.version = 11 : i64} {
  func.func @_patch_embed_kernel(%arg0: i32, %arg1: memref<64x128xbf16, #tpu.memory_space<vmem>>, %arg2: memref<128x32xbf16, #tpu.memory_space<vmem>>, %arg3: memref<1x32xf32, #tpu.memory_space<vmem>>, %arg4: memref<64x32xbf16, #tpu.memory_space<vmem>>) attributes {dimension_semantics = [#tpu.dimension_semantics<parallel>], iteration_bounds = array<i64: 2>, scalar_prefetch = 0 : i64, scratch_operands = 0 : i64, tpu.core_type = #tpu.core_type<tc>, window_params = [{transform_indices = @transform_0, window_bounds = array<i64: 64, 128>}, {pipeline_mode = #tpu.pipeline_mode<synchronous>, transform_indices = @transform_1, window_bounds = array<i64: 128, 32>}, {pipeline_mode = #tpu.pipeline_mode<synchronous>, transform_indices = @transform_2, window_bounds = array<i64: 1, 32>}, {transform_indices = @transform_3, window_bounds = array<i64: 64, 32>}]} {
    %c0 = arith.constant 0 : index
    %c0_0 = arith.constant 0 : index
    %0 = vector.load %arg1[%c0, %c0_0] : memref<64x128xbf16, #tpu.memory_space<vmem>>, vector<64x128xbf16>
    %c0_1 = arith.constant 0 : index
    %c0_2 = arith.constant 0 : index
    %1 = vector.load %arg2[%c0_1, %c0_2] : memref<128x32xbf16, #tpu.memory_space<vmem>>, vector<128x32xbf16>
    %cst = arith.constant dense<0.000000e+00> : vector<64x32xf32>
    %2 = tpu.matmul %0, %1, %cst {dimension_numbers = #tpu.dot_dimension_numbers<[1], [0], [0], [1], [0, 0, 1, 1], [], []>} : vector<64x128xbf16>, vector<128x32xbf16>, vector<64x32xf32> -> vector<64x32xf32>
    %c0_3 = arith.constant 0 : index
    %c0_4 = arith.constant 0 : index
    %3 = vector.load %arg3[%c0_3, %c0_4] : memref<1x32xf32, #tpu.memory_space<vmem>>, vector<1x32xf32>
    %4 = vector.broadcast %3 : vector<1x32xf32> to vector<64x32xf32>
    %5 = arith.addf %2, %4 : vector<64x32xf32>
    %6 = arith.truncf %5 : vector<64x32xf32> to vector<64x32xbf16>
    %c0_5 = arith.constant 0 : index
    %c0_6 = arith.constant 0 : index
    %7 = vector.load %arg4[%c0_5, %c0_6] : memref<64x32xbf16, #tpu.memory_space<vmem>>, vector<64x32xbf16>
    tpu.vector_store %arg4[%c0_5, %c0_6], %6 {strides = array<i32>} : memref<64x32xbf16, #tpu.memory_space<vmem>>, vector<64x32xbf16>,
    return
  }
  func.func @transform_0(%arg0: i32) -> (i32, i32) {
    %c0_i32 = arith.constant 0 : i32
    %c0_i32_0 = arith.constant 0 : i32
    return %arg0, %c0_i32 : i32, i32
  }
  func.func @transform_1(%arg0: i32) -> (i32, i32) {
    %c0_i32 = arith.constant 0 : i32
    %c0_i32_0 = arith.constant 0 : i32
    %c0_i32_1 = arith.constant 0 : i32
    return %c0_i32, %c0_i32_0 : i32, i32
  }
  func.func @transform_2(%arg0: i32) -> (i32, i32) {
    %c0_i32 = arith.constant 0 : i32
    %c0_i32_0 = arith.constant 0 : i32
    %c0_i32_1 = arith.constant 0 : i32
    return %c0_i32, %c0_i32_0 : i32, i32
  }
  func.func @transform_3(%arg0: i32) -> (i32, i32) {
    %c0_i32 = arith.constant 0 : i32
    %c0_i32_0 = arith.constant 0 : i32
    return %arg0, %c0_i32 : i32, i32
  }
}

</mosaic_0001>

<llo_original>
// kernel: _lambda_.1
$region0: #{_lambda_.1}
  #allocation0 [shape = 'u32[]', space=smem, size = 0x4, offset = 0x4, fixed_abs, tag = 'smem constant byte address 0x4 - core index']
  #allocation1 [shape = 'u32[144,128]{1,0:T(1,128)}', space=vmem, size = 0x12000, scoped, tag = 'internal scratch']
  %s0 = inlined_call_operand.vmem [shape: bf16[128,128], index: 0, kind: input, shape index: {}]
  %s1 = inlined_call_operand.vmem [shape: bf16[128,32], index: 1, kind: input, shape index: {}]
  %s2 = inlined_call_operand.vmem [shape: f32[1,32], index: 2, kind: input, shape index: {}]
  %s3 = inlined_call_operand.vmem [shape: bf16[128,32], index: 3, kind: output, shape index: {}]
  %s4 = sld [smem:[#allocation0]]
  $region45: #{_lambda_.1} parent=0
    _
  %s6 = ssub.s32 1, %s4
  %s7 = scalar_select 0, %s6, %s4
  loop: start=0, step=1, limit=4
  $region2: #{_lambda_.1} parent=0 // loop_pre_header
    _
  $region3: #{_lambda_.1} parent=0 // loop_header
    %s9 = sphi 0, %s13
    %p10 = scmp.ge.s32.totalorder %s9, 4
    %s19 = sphi 0, %s21
    %s22 = sphi 0, %s19
    %s23 = sphi 0, %s22
    %s39 = sphi 0, %s23
    %s43 = sphi 0, %s43
    %s45 = sphi 0, %s43
    %s46 = sphi 0, %s45
    %s60 = sphi 0, %s46
    %s64 = sphi 0, %s64
    %s66 = sphi 0, %s64
    %s67 = sphi 0, %s66
    %s81 = sphi 0, %s67
    %s87 = sphi 0, %s89
    %s90 = sphi 0, %s87
    %s91 = sphi 0, %s90
    %s107 = sphi 0, %s91
  $region4: #{_lambda_.1} parent=0 // loop_header_branch
    %12 = sbr.rel (%p10) target = $region8
  $region5: #{_lambda_.1} parent=0 // loop_body
    %s14 = ssub.s32 %s9, 1
    %s15 = ssub.s32 %s9, 2
    %s16 = sadd.s32 %s9, 1
    %s17 = ssub.s32 %s9, %s16
    %p18 = scmp.eq.s32.totalorder %s17, 0
    %s20 = sadd.s32 %s19, 1
    %s21 = scalar_select %p18, %s19, %s20
    %p24 = pneg %p18
    %p25 = scmp.eq.s32.totalorder %s9, 1
    %p26 = por %p24, %p25
    %p27 = scmp.ne.s32.totalorder %s19, %s22
    %p28 = scmp.eq.s32.totalorder %s9, 0
    %p29 = por %p27, %p28
    %p30 = scmp.ne.s32.totalorder %s19, %s22
    %p31 = scmp.eq.s32.totalorder %s14, 1
    %p32 = por %p30, %p31
    %p33 = scmp.ne.s32.totalorder %s22, %s23
    %p34 = scmp.eq.s32.totalorder %s14, 0
    %p35 = por %p33, %p34
    %p36 = scmp.ne.s32.totalorder %s22, %s23
    %p37 = scmp.eq.s32.totalorder %s15, 1
    %p38 = por %p36, %p37
    %p40 = scmp.ne.s32.totalorder %s23, %s39
    %p41 = scmp.eq.s32.totalorder %s15, 0
    %p42 = por %p40, %p41
    %s44 = sadd.s32 %s43, 1
    %p47 = scmp.eq.s32.totalorder %s9, 1
    %p48 = scmp.ne.s32.totalorder %s43, %s45
    %p49 = scmp.eq.s32.totalorder %s9, 0
    %p50 = por %p48, %p49
    %p51 = scmp.ne.s32.totalorder %s43, %s45
    %p52 = scmp.eq.s32.totalorder %s14, 1
    %p53 = por %p51, %p52
    %p54 = scmp.ne.s32.totalorder %s45, %s46
    %p55 = scmp.eq.s32.totalorder %s14, 0
    %p56 = por %p54, %p55
    %p57 = scmp.ne.s32.totalorder %s45, %s46
    %p58 = scmp.eq.s32.totalorder %s15, 1
    %p59 = por %p57, %p58
    %p61 = scmp.ne.s32.totalorder %s46, %s60
    %p62 = scmp.eq.s32.totalorder %s15, 0
    %p63 = por %p61, %p62
    %s65 = sadd.s32 %s64, 1
    %p68 = scmp.eq.s32.totalorder %s9, 1
    %p69 = scmp.ne.s32.totalorder %s64, %s66
    %p70 = scmp.eq.s32.totalorder %s9, 0
    %p71 = por %p69, %p70
    %p72 = scmp.ne.s32.totalorder %s64, %s66
    %p73 = scmp.eq.s32.totalorder %s14, 1
    %p74 = por %p72, %p73
    %p75 = scmp.ne.s32.totalorder %s66, %s67
    %p76 = scmp.eq.s32.totalorder %s14, 0
    %p77 = por %p75, %p76
    %p78 = scmp.ne.s32.totalorder %s66, %s67
    %p79 = scmp.eq.s32.totalorder %s15, 1
    %p80 = por %p78, %p79
    %p82 = scmp.ne.s32.totalorder %s67, %s81
    %p83 = scmp.eq.s32.totalorder %s15, 0
    %p84 = por %p82, %p83
    %s85 = ssub.s32 %s9, %s16
    %p86 = scmp.eq.s32.totalorder %s85, 0
    %s88 = sadd.s32 %s87, 1
    %s89 = scalar_select %p86, %s87, %s88
    %p92 = pneg %p86
    %p93 = scmp.eq.s32.totalorder %s9, 1
    %p94 = por %p92, %p93
    %p95 = scmp.ne.s32.totalorder %s87, %s90
    %p96 = scmp.eq.s32.totalorder %s9, 0
    %p97 = por %p95, %p96
    %p98 = scmp.ne.s32.totalorder %s87, %s90
    %p99 = scmp.eq.s32.totalorder %s14, 1
    %p100 = por %p98, %p99
    %p101 = scmp.ne.s32.totalorder %s90, %s91
    %p102 = scmp.eq.s32.totalorder %s14, 0
    %p103 = por %p101, %p102
    %p104 = scmp.ne.s32.totalorder %s90, %s91
    %p105 = scmp.eq.s32.totalorder %s15, 1
    %p106 = por %p104, %p105
    %p108 = scmp.ne.s32.totalorder %s91, %s107
    %p109 = scmp.eq.s32.totalorder %s15, 0
    %p110 = por %p108, %p109
    %p111 = scmp.le.s32.totalorder 1, %s9
    %p112 = scmp.lt.s32.totalorder %s9, 3
    %p113 = pnand %p111, %p112
    %p114 = pneg %p113
    // Predicated region
    $region9: #{_lambda_.1} parent=5 // pred_check
      _
    $region10: #{_lambda_.1} parent=5 // pred_check_branch
      %116 = sbr.rel (%p113) target = $region12
    $region11: #{_lambda_.1} parent=5 // pred_region
      %s117 = ssub.s32 %s9, 1
      // Predicated region
      $region13: #{_lambda_.1} parent=11 // pred_check
        %p118 = pneg %p56
      $region14: #{_lambda_.1} parent=11 // pred_check_branch
        %120 = sbr.rel (%p118) target = $region16
      $region15: #{_lambda_.1} parent=11 // pred_region
        _
      $region16: #{_lambda_.1} parent=11 // pred_fallthru
        _
      // Predicated region
      $region17: #{_lambda_.1} parent=11 // pred_check
        %p121 = pneg %p77
      $region18: #{_lambda_.1} parent=11 // pred_check_branch
        %123 = sbr.rel (%p121) target = $region20
      $region19: #{_lambda_.1} parent=11 // pred_region
        _
      $region20: #{_lambda_.1} parent=11 // pred_fallthru
        _
    $region12: #{_lambda_.1} parent=5 // pred_fallthru
      _
    %p124 = scmp.lt.s32.totalorder %s9, 2
    // Predicated region
    $region21: #{_lambda_.1} parent=5 // pred_check
      %p125 = pneg %p124
    $region22: #{_lambda_.1} parent=5 // pred_check_branch
      %127 = sbr.rel (%p125) target = $region24
    $region23: #{_lambda_.1} parent=5 // pred_region
      // Predicated region
      $region25: #{_lambda_.1} parent=23 // pred_check
        %p128 = pneg %p29
      $region26: #{_lambda_.1} parent=23 // pred_check_branch
        %130 = sbr.rel (%p128) target = $region28
      $region27: #{_lambda_.1} parent=23 // pred_region
        %s131 = smul.u32 8, %s9
        %p132 = scmp.lt.s32.totalorder %s131, 15
        %s133 = scalar_select %p132, %s131, 15
        %s134 = smul.addr %s133, 4
        %s135 = scalar_lea.vmem %s0, %s134
        %s136 = smul.u32 8, %s9
      $region28: #{_lambda_.1} parent=23 // pred_fallthru
        _
    $region24: #{_lambda_.1} parent=5 // pred_fallthru
      _
    %p137 = scmp.le.s32.totalorder 1, %s9
    %p138 = scmp.lt.s32.totalorder %s9, 3
    %p139 = pnand %p137, %p138
    %p140 = pneg %p139
    // Predicated region
    $region29: #{_lambda_.1} parent=5 // pred_check
      _
    $region30: #{_lambda_.1} parent=5 // pred_check_branch
      %142 = sbr.rel (%p139) target = $region32
    $region31: #{_lambda_.1} parent=5 // pred_region
      %s143 = ssub.s32 %s9, 1
      %s144 = smul.u32 8, %s14
      %p145 = scmp.lt.s32.totalorder %s144, 15
      %s146 = scalar_select %p145, %s144, 15
      %s147 = smul.addr %s146, 4
      %s148 = scalar_lea.vmem %s0, %s147
      %p149 = pneg %p35
      %p150 = pneg %p32
      %p151 = pneg %p56
      %p152 = pneg %p53
      %p153 = pneg %p77
      %p154 = pneg %p74
      %p155 = pneg %p103
      %p156 = pneg %p100
      %s157 = smul.u32 8, %s14
      %p158 = scmp.lt.s32.totalorder %s157, 15
      %s159 = scalar_select %p158, %s157, 15
      %s160 = smul.addr %s159, 4
      %s161 = scalar_lea.vmem %s3, %s160
      %s162 = smul.u32 8, %s14
      %p163 = scmp.lt.s32.totalorder %s162, 15
      %s164 = scalar_select %p163, %s162, 15
      %s165 = smul.addr %s164, 4
      %s166 = scalar_lea.vmem %s0, %s165
      %s167 = smul.u32 8, %s14
      %s168 = smul.u32 8, %s14
      %p169 = scmp.lt.s32.totalorder %s168, 15
      %s170 = scalar_select %p169, %s168, 15
      %s171 = smul.addr %s170, 4
      %s172 = scalar_lea.vmem %s3, %s171
      %s173 = smul.u32 8, %s14
      %v175 = vld [vmem:[%s166] sm:$0xf]
      %v176 = vld [vmem:[%s166 + $0x4] sm:$0xf]
      %v177 = vld [vmem:[%s166 + $0x8] sm:$0xf]
      %v178 = vld [vmem:[%s166 + $0xc] sm:$0xf]
      %v179 = vld [vmem:[%s166 + $0x10] sm:$0xf]
      %v180 = vld [vmem:[%s166 + $0x14] sm:$0xf]
      %v181 = vld [vmem:[%s166 + $0x18] sm:$0xf]
      %v182 = vld [vmem:[%s166 + $0x1c] sm:$0xf]
      %v183 = vld [vmem:[%s1] sm:$0xf]
      %v184 = vld [vmem:[%s1 + $0x4] sm:$0xf]
      %v185 = vld [vmem:[%s1 + $0x8] sm:$0xf]
      %v186 = vld [vmem:[%s1 + $0xc] sm:$0xf]
      %v187 = vld [vmem:[%s1 + $0x10] sm:$0xf]
      %v188 = vld [vmem:[%s1 + $0x14] sm:$0xf]
      %v189 = vld [vmem:[%s1 + $0x18] sm:$0xf]
      %v190 = vld [vmem:[%s1 + $0x1c] sm:$0xf]
      %v191 = vld [vmem:[%s1 + $0x20] sm:$0xf]
      %v192 = vld [vmem:[%s1 + $0x24] sm:$0xf]
      %v193 = vld [vmem:[%s1 + $0x28] sm:$0xf]
      %v194 = vld [vmem:[%s1 + $0x2c] sm:$0xf]
      %v195 = vld [vmem:[%s1 + $0x30] sm:$0xf]
      %v196 = vld [vmem:[%s1 + $0x34] sm:$0xf]
      %v197 = vld [vmem:[%s1 + $0x38] sm:$0xf]
      %v198 = vld [vmem:[%s1 + $0x3c] sm:$0xf]
      %v199 = vld [vmem:[%s2] sm:$0x1]
      %v201 = vlaneseq
      %v202 = vshrl.u32 %v201, 7
      %v203 = vsub.s32 0, %v202
      %v204 = vrot.slane %v199, %v203
      %v214 = vunpack.c.l.b16 %v175
      %v215 = vunpack.c.l.b16 %v176
      %v216 = vunpack.c.l.b16 %v177
      %v217 = vunpack.c.l.b16 %v178
      %v218 = vunpack.c.l.b16 %v179
      %v219 = vunpack.c.l.b16 %v180
      %v220 = vunpack.c.l.b16 %v181
      %v221 = vunpack.c.l.b16 %v182
      %v222 = vpack.c.b16 %v215, %v214
      %v223 = vpack.c.b16 %v217, %v216
      %v224 = vpack.c.b16 %v219, %v218
      %v225 = vpack.c.b16 %v221, %v220
      %v246 = vunpack.c.l.b16 %v183
      %v247 = vunpack.c.l.b16 %v184
      %v248 = vunpack.c.l.b16 %v185
      %v249 = vunpack.c.l.b16 %v186
      %v250 = vunpack.c.l.b16 %v187
      %v251 = vunpack.c.l.b16 %v188
      %v252 = vunpack.c.l.b16 %v189
      %v253 = vunpack.c.l.b16 %v190
      %v254 = vunpack.c.l.b16 %v191
      %v255 = vunpack.c.l.b16 %v192
      %v256 = vunpack.c.l.b16 %v193
      %v257 = vunpack.c.l.b16 %v194
      %v258 = vunpack.c.l.b16 %v195
      %v259 = vunpack.c.l.b16 %v196
      %v260 = vunpack.c.l.b16 %v197
      %v261 = vunpack.c.l.b16 %v198
      %v262 = vpack.c.b16 %v247, %v246
      %v263 = vpack.c.b16 %v249, %v248
      %v264 = vpack.c.b16 %v251, %v250
      %v265 = vpack.c.b16 %v253, %v252
      %v266 = vpack.c.b16 %v255, %v254
      %v267 = vpack.c.b16 %v257, %v256
      %v268 = vpack.c.b16 %v259, %v258
      %v269 = vpack.c.b16 %v261, %v260
      %278 = vmatprep.subr.bf16.mxu0 0
      %279 = vmatpush1.bf16.msra.mxu0 %v262
      %280 = vmatprep.subr.bf16.mxu0 0
      %281 = vmatpush1.bf16.msra.mxu0 %v263
      %282 = vmatprep.subr.bf16.mxu0 0
      %283 = vmatpush1.bf16.msra.mxu0 %v264
      %284 = vmatprep.subr.bf16.mxu0 0
      %285 = vmatpush1.bf16.msra.mxu0 %v265
      %286 = vmatprep.subr.bf16.mxu0 0
      %287 = vmatpush1.bf16.msra.mxu0 %v266
      %288 = vmatprep.subr.bf16.mxu0 0
      %289 = vmatpush1.bf16.msra.mxu0 %v267
      %290 = vmatprep.subr.bf16.mxu0 0
      %291 = vmatpush1.bf16.msra.mxu0 %v268
      %292 = vmatprep.subr.bf16.mxu0 0
      %293 = vmatpush1.bf16.msra.mxu0 %v269
      %294 = vmatprep.subr.bf16.mxu0 0
      %295 = vmatpush1.bf16.msra.mxu0 0
      %296 = vmatprep.subr.bf16.mxu0 0
      %297 = vmatpush1.bf16.msra.mxu0 0
      %298 = vmatprep.subr.bf16.mxu0 0
      %299 = vmatpush1.bf16.msra.mxu0 0
      %300 = vmatprep.subr.bf16.mxu0 0
      %301 = vmatpush1.bf16.msra.mxu0 0
      %302 = vmatprep.subr.bf16.mxu0 0
      %303 = vmatpush1.bf16.msra.mxu0 0
      %304 = vmatprep.subr.bf16.mxu0 0
      %305 = vmatpush1.bf16.msra.mxu0 0
      %306 = vmatprep.subr.bf16.mxu0 0
      %307 = vmatpush1.bf16.msra.mxu0 0
      %308 = vmatprep.subr.bf16.mxu0 0
      %309 = vmatpush1.bf16.msra.mxu0 0
      %310 = vmatprep.mubr.bf16.mxu0 0
      %311 = vmatmul.mubr.bf16.gmra.mrb[0].mxu0 %v222
      %v312 = vpop.f32.mrb[0].mxu0
      %v313 = vadd.f32 %v204, %v312
      %v314 = vpop.f32.mrb[0].mxu0
      %v315 = vpop.f32.mrb[0].mxu0
      %v316 = vadd.f32 %v204, %v315
      %v317 = vpop.f32.mrb[0].mxu0
      %318 = vmatprep.mubr.bf16.mxu0 0
      %319 = vmatmul.mubr.bf16.gmra.mrb[0].mxu0 %v223
      %v320 = vpop.f32.mrb[0].mxu0
      %v321 = vadd.f32 %v204, %v320
      %v322 = vpop.f32.mrb[0].mxu0
      %v323 = vpop.f32.mrb[0].mxu0
      %v324 = vadd.f32 %v204, %v323
      %v325 = vpop.f32.mrb[0].mxu0
      %326 = vmatprep.mubr.bf16.mxu0 0
      %327 = vmatmul.mubr.bf16.gmra.mrb[0].mxu0 %v224
      %v328 = vpop.f32.mrb[0].mxu0
      %v329 = vadd.f32 %v204, %v328
      %v330 = vpop.f32.mrb[0].mxu0
      %v331 = vpop.f32.mrb[0].mxu0
      %v332 = vadd.f32 %v204, %v331
      %v333 = vpop.f32.mrb[0].mxu0
      %334 = vmatprep.mubr.bf16.mxu0 0
      %335 = vmatmul.mubr.bf16.gmra.mrb[0].mxu0 %v225
      %v336 = vpop.f32.mrb[0].mxu0
      %v337 = vadd.f32 %v204, %v336
      %v338 = vpop.f32.mrb[0].mxu0
      %v339 = vpop.f32.mrb[0].mxu0
      %v340 = vadd.f32 %v204, %v339
      %v341 = vpop.f32.mrb[0].mxu0
      %342 = vdwg.mxu0
      %v343 = vpack.c.bf16 %v316, %v313
      %v344 = vpack.c.bf16 %v324, %v321
      %v345 = vpack.c.bf16 %v332, %v329
      %v346 = vpack.c.bf16 %v340, %v337
      %v351 = vunpack.c.l.b16 %v343
      %v352 = vunpack.c.h.b16 %v343
      %v353 = vunpack.c.l.b16 %v344
      %v354 = vunpack.c.h.b16 %v344
      %v355 = vunpack.c.l.b16 %v345
      %v356 = vunpack.c.h.b16 %v345
      %v357 = vunpack.c.l.b16 %v346
      %v358 = vunpack.c.h.b16 %v346
      %v359 = vpack.c.b16 %v351, %v351
      %v360 = vpack.c.b16 %v352, %v352
      %v361 = vpack.c.b16 %v353, %v353
      %v362 = vpack.c.b16 %v354, %v354
      %v363 = vpack.c.b16 %v355, %v355
      %v364 = vpack.c.b16 %v356, %v356
      %v365 = vpack.c.b16 %v357, %v357
      %v366 = vpack.c.b16 %v358, %v358
      %vm375 = vcmask 257024
      %376 = vst.msk [vmem:[%s172] sm:$0xf] %vm375, %v359
      %377 = vst.msk [vmem:[%s172 + $0x4] sm:$0xf] %vm375, %v360
      %378 = vst.msk [vmem:[%s172 + $0x8] sm:$0xf] %vm375, %v361
      %379 = vst.msk [vmem:[%s172 + $0xc] sm:$0xf] %vm375, %v362
      %380 = vst.msk [vmem:[%s172 + $0x10] sm:$0xf] %vm375, %v363
      %381 = vst.msk [vmem:[%s172 + $0x14] sm:$0xf] %vm375, %v364
      %382 = vst.msk [vmem:[%s172 + $0x18] sm:$0xf] %vm375, %v365
      %383 = vst.msk [vmem:[%s172 + $0x1c] sm:$0xf] %vm375, %v366
      %s384 = smul.u32 8, %s14
      %p385 = scmp.lt.s32.totalorder %s384, 15
      %s386 = scalar_select %p385, %s384, 15
      %s387 = smul.addr %s386, 4
      %s388 = scalar_lea.vmem %s3, %s387
      // Predicated region
      $region33: #{_lambda_.1} parent=31 // pred_check
        %p389 = pneg %p100
      $region34: #{_lambda_.1} parent=31 // pred_check_branch
        %391 = sbr.rel (%p389) target = $region36
      $region35: #{_lambda_.1} parent=31 // pred_region
        %s392 = smul.u32 8, %s14
      $region36: #{_lambda_.1} parent=31 // pred_fallthru
        _
    $region32: #{_lambda_.1} parent=5 // pred_fallthru
      _
    %p393 = scmp.le.s32.totalorder 2, %s9
    // Predicated region
    $region37: #{_lambda_.1} parent=5 // pred_check
      %p394 = pneg %p393
    $region38: #{_lambda_.1} parent=5 // pred_check_branch
      %396 = sbr.rel (%p394) target = $region40
    $region39: #{_lambda_.1} parent=5 // pred_region
      %s397 = ssub.s32 %s9, 2
      // Predicated region
      $region41: #{_lambda_.1} parent=39 // pred_check
        %p398 = pneg %p106
      $region42: #{_lambda_.1} parent=39 // pred_check_branch
        %400 = sbr.rel (%p398) target = $region44
      $region43: #{_lambda_.1} parent=39 // pred_region
        %s401 = smul.u32 8, %s15
        %p402 = scmp.lt.s32.totalorder %s401, 15
        %s403 = scalar_select %p402, %s401, 15
        %s404 = smul.addr %s403, 4
        %s405 = scalar_lea.vmem %s3, %s404
      $region44: #{_lambda_.1} parent=39 // pred_fallthru
        _
    $region40: #{_lambda_.1} parent=5 // pred_fallthru
      _
  $region6: #{_lambda_.1} parent=0 // loop_footer
    %s13 = sadd.s32 1, %s9
  $region7: #{_lambda_.1} parent=0 // loop_footer_branch
    %8 = sbr.rel target = $region3
  $region8: #{_lambda_.1} parent=0 // loop_exit
    _

</llo_original>
